<compile_context>
chip_gen: v5e
topology: v5e:2x2
jax: 0.10.0
libtpu: 0.0.40
codegen_flags: <defaults>
</compile_context>

<pallas_src>
import jax
import jax.numpy as jnp
from jax.experimental import pallas as pl
from jax.experimental.pallas import tpu as pltpu


def _round_up(n, m):
    return ((n + m - 1) // m) * m


def _tpu_vmem_info():
    """Returns (vmem_capacity_bytes, looks_like_v7x). Conservative fallback."""
    vmem_cap = None
    try:
        info = pltpu.get_tpu_info()
        vmem_cap = getattr(info, "vmem_capacity_bytes", None)
    except Exception:
        vmem_cap = None
    if not vmem_cap:
        # Unknown chip: assume the tightest VMEM (v7x, 64 MiB) and dual-TC.
        return 64 * 1024 * 1024, True
    vmem_cap = int(vmem_cap)
    return vmem_cap, vmem_cap < 100 * 1024 * 1024


def make_cnn_kernel(TB, La, K, I, Ha, fuse_taps):
    def cnn_kernel(x_ref, w_ref, b_ref, o_ref):
        # x_ref: (TB, Lpa, I)  compute_dtype, conv-'same' + alignment zero-padded slab
        # w_ref: (K, I, Ha)    compute_dtype, tap-major conv weight
        # b_ref: (1, Ha)       f32 bias
        # o_ref: (TB, La, Ha)  output (La sublane-aligned, Ha lane-dense)
        if fuse_taps:
            # I is a multiple of 128: lane-aligned concat -> one tall MXU matmul.
            windows = [x_ref[:, k:k + La, :].reshape(TB * La, I) for k in range(K)]
            lhs = jnp.concatenate(windows, axis=-1)                  # (TB*La, K*I)
            acc = jnp.dot(lhs, w_ref[...].reshape(K * I, Ha),
                          preferred_element_type=jnp.float32)        # (TB*La, Ha)
        else:
            # Narrow I: K accumulating matmuls, no cross-lane concat, no Kx temp.
            acc = None
            for k in range(K):
                lhs = x_ref[:, k:k + La, :].reshape(TB * La, I)      # compute_dtype
                part = jnp.dot(lhs, w_ref[k],
                               preferred_element_type=jnp.float32)   # (TB*La, Ha)
                acc = part if acc is None else acc + part
        out = jnp.maximum(acc + b_ref[...], 0.0)                     # bias + ReLU, f32
        # TODO(synk): Dropout(p=0) is the identity; a non-zero p (training mode)
        #             would need pltpu.prng_seed + pltpu.prng_random_bits masking.
        o_ref[...] = out.reshape(TB, La, Ha).astype(o_ref.dtype)
    return cnn_kernel


def cnn_forward(x, weight, bias, *, padding=1, compute_dtype=jnp.bfloat16,
                out_dtype=None, batch_tile=None):
    """x: (B, L, I); weight: (H, I, K) (PyTorch Conv1d layout); bias: (H,)."""
    B, L, I = x.shape
    H, I_w, K = weight.shape
    assert I == I_w
    assert 2 * padding == K - 1, "kernel assumes a 'same' conv: 2*padding == K-1"
    out_dtype = x.dtype if out_dtype is None else out_dtype

    La = _round_up(L, 8)                    # sublane-aligned output rows
    Lpa = _round_up(La + K - 1, 8)          # sublane-aligned input slab height
    Ha = _round_up(H, 128)                  # lane-dense output / weight width

    cd = jnp.dtype(compute_dtype).itemsize
    od = jnp.dtype(out_dtype).itemsize
    fuse_taps = (I % 128 == 0)

    # --- generation-aware VMEM budget (v5e/v6e: 64/48 MiB, v7x: 32/24 MiB) ---
    vmem_cap, is_v7x = _tpu_vmem_info()
    vmem_limit = int(min(vmem_cap // 2, 96 * 1024 * 1024))
    vmem_budget = (3 * vmem_limit) // 4

    def _vmem_bytes(tb):
        # Double-buffered pipelined blocks + grid-invariant weight/bias (still 2x)
        blocks = 2 * tb * Lpa * I * cd + 2 * tb * La * Ha * od
        fixed = 2 * (K * I * Ha * cd + Ha * 4)
        # In-kernel intermediates (window copies, concat lhs, f32 acc + temp).
        if fuse_taps:
            inter = (tb * La * K * I * cd + K * tb * La * I * cd
                     + 2 * tb * La * Ha * 4)
        else:
            inter = tb * La * I * cd + 2 * tb * La * Ha * 4
        return blocks + fixed + inter

    # --- batch tile: biggest-block-that-fits (mem-bound rule), dividing B ---
    max_tb = B
    if is_v7x and B >= 2:
        max_tb = max(1, B // 2)             # keep grid >= 2 for the two TensorCores
    if batch_tile is not None:
        max_tb = max(1, min(max_tb, batch_tile))
    TB = 1
    for cand in range(max_tb, 0, -1):
        if B % cand == 0 and _vmem_bytes(cand) <= vmem_budget:
            TB = cand
            break
    grid = B // TB

    # --- glue: conv 'same' pad + sublane alignment + compute-dtype cast.
    # The pad fuses with the cast into a single pass over x; the cast is wanted
    # anyway (halves kernel input DMA bytes), so the pad adds no extra traffic.
    x_pad = jnp.pad(
        x, ((0, 0), (padding, padding + (Lpa - (L + 2 * padding))), (0, 0))
    ).astype(compute_dtype)                                                  # (B, Lpa, I)
    w_km = jnp.transpose(weight, (2, 1, 0))                                  # (K, I, H) tap-major
    w_km = jnp.pad(w_km, ((0, 0), (0, 0), (0, Ha - H))).astype(compute_dtype)
    b_pad = jnp.pad(bias, (0, Ha - H)).reshape(1, Ha).astype(jnp.float32)

    kernel = make_cnn_kernel(TB, La, K, I, Ha, fuse_taps)

    out = pl.pallas_call(
        kernel,
        out_shape=jax.ShapeDtypeStruct((B, La, Ha), out_dtype),
        grid_spec=pltpu.PrefetchScalarGridSpec(
            num_scalar_prefetch=0,
            grid=(grid,),
            in_specs=[
                pl.BlockSpec((TB, Lpa, I), lambda i: (i, 0, 0)),
                # grid-invariant weight/bias: constant index_map -> fetched once.
                pl.BlockSpec((K, I, Ha), lambda i: (0, 0, 0)),
                pl.BlockSpec((1, Ha), lambda i: (0, 0)),
            ],
            out_specs=pl.BlockSpec((TB, La, Ha), lambda i: (i, 0, 0)),
        ),
        compiler_params=pltpu.CompilerParams(
            dimension_semantics=("parallel",),
            vmem_limit_bytes=vmem_limit,
        ),
    )(x_pad, w_km, b_pad)

    # No-ops when L % 8 == 0 and H % 128 == 0 (e.g. production H=256).
    # For H << 128 this slice is the acknowledged cost of lane-dense stores.
    return out[:, :L, :H]


def cnn_reference(x, weight, bias, *, padding=1):
    """Plain-JAX reference matching PyTorch Conv1d('same') + ReLU semantics."""
    B, L, I = x.shape
    H, _, K = weight.shape
    x_pad = jnp.pad(x, ((0, 0), (padding, padding), (0, 0)))
    acc = jnp.zeros((B, L, H), jnp.float32)
    for k in range(K):
        acc = acc + jnp.einsum("bli,hi->blh", x_pad[:, k:k + L, :],
                               weight[:, :, k])
    return jnp.maximum(acc + bias[None, None, :], 0.0)


if __name__ == "__main__":
    # Small shapes consistent with the module's forward: (B, L, I) -> (B, L, H)
    B, L, I, H, K = 2, 8, 32, 32, 3

    key = jax.random.PRNGKey(0)
    kx, kw, kb = jax.random.split(key, 3)
    x = jax.random.normal(kx, (B, L, I), dtype=jnp.float32)
    # Deterministic Conv1d parameters (PyTorch layout: (H, I, K)).
    weight = jax.random.normal(kw, (H, I, K), dtype=jnp.float32) * 0.1
    bias = jax.random.normal(kb, (H,), dtype=jnp.float32) * 0.1

    ref = cnn_reference(x, weight, bias)

    # f32 compute path: tight check against the PyTorch-equivalent reference.
    out_f32 = jax.block_until_ready(
        cnn_forward(x, weight, bias, compute_dtype=jnp.float32))
    assert out_f32.shape == (B, L, H)
    assert jnp.allclose(out_f32, ref, atol=1e-4, rtol=1e-4)

    # bf16 compute path (default, MXU-native): looser tolerance for operand cast.
    out = jax.block_until_ready(cnn_forward(x, weight, bias))
    assert out.shape == (B, L, H)
    assert jnp.allclose(out, ref, atol=2e-2, rtol=2e-2)

    print("KERNEL_OK")
</pallas_src>

<mosaic_0001>
module attributes {stable_mosaic.version = 11 : i64} {
  func.func @cnn_kernel(%arg0: i32, %arg1: memref<1x16x32xf32, #tpu.memory_space<vmem>>, %arg2: memref<3x32x128xf32, #tpu.memory_space<vmem>>, %arg3: memref<1x128xf32, #tpu.memory_space<vmem>>, %arg4: memref<1x8x128xf32, #tpu.memory_space<vmem>>) attributes {dimension_semantics = [#tpu.dimension_semantics<parallel>], iteration_bounds = array<i64: 2>, scalar_prefetch = 0 : i64, scratch_operands = 0 : i64, tpu.core_type = #tpu.core_type<tc>, window_params = [{transform_indices = @transform_0, window_bounds = array<i64: 1, 16, 32>}, {pipeline_mode = #tpu.pipeline_mode<synchronous>, transform_indices = @transform_1, window_bounds = array<i64: 3, 32, 128>}, {pipeline_mode = #tpu.pipeline_mode<synchronous>, transform_indices = @transform_2, window_bounds = array<i64: 1, 128>}, {transform_indices = @transform_3, window_bounds = array<i64: 1, 8, 128>}]} {
    %c0 = arith.constant 0 : index
    %c0_0 = arith.constant 0 : index
    %c0_1 = arith.constant 0 : index
    %0 = vector.load %arg1[%c0, %c0_0, %c0_1] : memref<1x16x32xf32, #tpu.memory_space<vmem>>, vector<1x8x32xf32>
    %1 = vector.shape_cast %0 : vector<1x8x32xf32> to vector<8x32xf32>
    %c0_2 = arith.constant 0 : index
    %c0_3 = arith.constant 0 : index
    %c0_4 = arith.constant 0 : index
    %2 = vector.load %arg2[%c0_2, %c0_3, %c0_4] : memref<3x32x128xf32, #tpu.memory_space<vmem>>, vector<1x32x128xf32>
    %3 = vector.shape_cast %2 : vector<1x32x128xf32> to vector<32x128xf32>
    %cst = arith.constant dense<0.000000e+00> : vector<8x128xf32>
    %4 = tpu.matmul %1, %3, %cst {dimension_numbers = #tpu.dot_dimension_numbers<[1], [0], [0], [1], [0, 0, 1, 1], [], []>} : vector<8x32xf32>, vector<32x128xf32>, vector<8x128xf32> -> vector<8x128xf32>
    %c0_5 = arith.constant 0 : index
    %c1 = arith.constant 1 : index
    %c0_6 = arith.constant 0 : index
    %5 = vector.load %arg1[%c0_5, %c1, %c0_6] : memref<1x16x32xf32, #tpu.memory_space<vmem>>, vector<1x8x32xf32>
    %6 = vector.shape_cast %5 : vector<1x8x32xf32> to vector<8x32xf32>
    %c1_7 = arith.constant 1 : index
    %c0_8 = arith.constant 0 : index
    %c0_9 = arith.constant 0 : index
    %7 = vector.load %arg2[%c1_7, %c0_8, %c0_9] : memref<3x32x128xf32, #tpu.memory_space<vmem>>, vector<1x32x128xf32>
    %8 = vector.shape_cast %7 : vector<1x32x128xf32> to vector<32x128xf32>
    %cst_10 = arith.constant dense<0.000000e+00> : vector<8x128xf32>
    %9 = tpu.matmul %6, %8, %cst_10 {dimension_numbers = #tpu.dot_dimension_numbers<[1], [0], [0], [1], [0, 0, 1, 1], [], []>} : vector<8x32xf32>, vector<32x128xf32>, vector<8x128xf32> -> vector<8x128xf32>
    %10 = arith.addf %4, %9 : vector<8x128xf32>
    %c0_11 = arith.constant 0 : index
    %c2 = arith.constant 2 : index
    %c0_12 = arith.constant 0 : index
    %11 = vector.load %arg1[%c0_11, %c2, %c0_12] : memref<1x16x32xf32, #tpu.memory_space<vmem>>, vector<1x8x32xf32>
    %12 = vector.shape_cast %11 : vector<1x8x32xf32> to vector<8x32xf32>
    %c2_13 = arith.constant 2 : index
    %c0_14 = arith.constant 0 : index
    %c0_15 = arith.constant 0 : index
    %13 = vector.load %arg2[%c2_13, %c0_14, %c0_15] : memref<3x32x128xf32, #tpu.memory_space<vmem>>, vector<1x32x128xf32>
    %14 = vector.shape_cast %13 : vector<1x32x128xf32> to vector<32x128xf32>
    %cst_16 = arith.constant dense<0.000000e+00> : vector<8x128xf32>
    %15 = tpu.matmul %12, %14, %cst_16 {dimension_numbers = #tpu.dot_dimension_numbers<[1], [0], [0], [1], [0, 0, 1, 1], [], []>} : vector<8x32xf32>, vector<32x128xf32>, vector<8x128xf32> -> vector<8x128xf32>
    %16 = arith.addf %10, %15 : vector<8x128xf32>
    %c0_17 = arith.constant 0 : index
    %c0_18 = arith.constant 0 : index
    %17 = vector.load %arg3[%c0_17, %c0_18] : memref<1x128xf32, #tpu.memory_space<vmem>>, vector<1x128xf32>
    %18 = vector.broadcast %17 : vector<1x128xf32> to vector<8x128xf32>
    %19 = arith.addf %16, %18 : vector<8x128xf32>
    %cst_19 = arith.constant 0.000000e+00 : f32
    %20 = vector.broadcast %cst_19 : f32 to vector<8x128xf32>
    %21 = arith.maximumf %19, %20 : vector<8x128xf32>
    %22 = vector.shape_cast %21 : vector<8x128xf32> to vector<1x8x128xf32>
    %c0_20 = arith.constant 0 : index
    %c0_21 = arith.constant 0 : index
    %c0_22 = arith.constant 0 : index
    %23 = vector.load %arg4[%c0_20, %c0_21, %c0_22] : memref<1x8x128xf32, #tpu.memory_space<vmem>>, vector<1x8x128xf32>
    tpu.vector_store %arg4[%c0_20, %c0_21, %c0_22], %22 {strides = array<i32>} : memref<1x8x128xf32, #tpu.memory_space<vmem>>, vector<1x8x128xf32>,
    return
  }
  func.func @transform_0(%arg0: i32) -> (i32, i32, i32) {
    %c0_i32 = arith.constant 0 : i32
    %c0_i32_0 = arith.constant 0 : i32
    %c0_i32_1 = arith.constant 0 : i32
    return %arg0, %c0_i32, %c0_i32_0 : i32, i32, i32
  }
  func.func @transform_1(%arg0: i32) -> (i32, i32, i32) {
    %c0_i32 = arith.constant 0 : i32
    %c0_i32_0 = arith.constant 0 : i32
    %c0_i32_1 = arith.constant 0 : i32
    %c0_i32_2 = arith.constant 0 : i32
    return %c0_i32, %c0_i32_0, %c0_i32_1 : i32, i32, i32
  }
  func.func @transform_2(%arg0: i32) -> (i32, i32) {
    %c0_i32 = arith.constant 0 : i32
    %c0_i32_0 = arith.constant 0 : i32
    %c0_i32_1 = arith.constant 0 : i32
    return %c0_i32, %c0_i32_0 : i32, i32
  }
  func.func @transform_3(%arg0: i32) -> (i32, i32, i32) {
    %c0_i32 = arith.constant 0 : i32
    %c0_i32_0 = arith.constant 0 : i32
    %c0_i32_1 = arith.constant 0 : i32
    return %arg0, %c0_i32, %c0_i32_0 : i32, i32, i32
  }
}

</mosaic_0001>

<llo_original>
// kernel: tpu_custom_call.1
$region0: #{tpu_custom_call.1}
  #allocation0 [shape = 'u32[]', space=smem, size = 0x4, offset = 0x4, fixed_abs, tag = 'smem constant byte address 0x4 - core index']
  #allocation1 [shape = 'u32[72,128]{1,0:T(1,128)}', space=vmem, size = 0x9000, scoped, tag = 'internal scratch']
  %s0 = inlined_call_operand.hbm [shape: f32[2,16,32], index: 0, kind: input, shape index: {}]
  %s1 = inlined_call_operand.hbm [shape: f32[3,32,128], index: 1, kind: input, shape index: {}]
  %s2 = inlined_call_operand.vmem [shape: f32[1,128], index: 2, kind: input, shape index: {}]
  %s3 = inlined_call_operand.hbm [shape: f32[2,8,128], index: 3, kind: output, shape index: {}]
  %s4 = sld [smem:[#allocation0]]
  $region53: #{tpu_custom_call.1} parent=0
    _
  %s6 = ssub.s32 1, %s4
  %s7 = scalar_select 0, %s6, %s4
  $region1: #{tpu_custom_call.1} parent=0
    #allocation2 [shape = 'u8[16384]{0}', space=vmem, size = 0x4000, scoped, tag = 'input window, operand 0']
    #allocation3 [shape = 's32[2]{0}', space=sflag, size = 0x8, scoped, tag = 'scoped memory for tpu_custom_call.1']
    #allocation4 [shape = 's32[2]{0}', space=sflag, size = 0x8, scoped, tag = 'scoped memory for tpu_custom_call.1']
    #allocation5 [shape = 'u8[49152]{0}', space=vmem, size = 0xc000, scoped, tag = 'input window, operand 1, single buffered']
    #allocation6 [shape = 's32[1]{0}', space=sflag, size = 0x4, scoped, tag = 'scoped memory for tpu_custom_call.1']
    #allocation7 [shape = 'u8[8192]{0}', space=vmem, size = 0x2000, scoped, tag = 'output window, operand 0']
    %8 = vsyncpa [#allocation3], 0
    %s9 = scalar_lea.sflag [#allocation3], 1
    %10 = vsyncpa %s9, 0
    %11 = vsyncpa [#allocation6], 0
    %12 = vsyncpa [#allocation4], 0
    %s13 = scalar_lea.sflag [#allocation4], 1
    %14 = vsyncpa %s13, 0
    loop: start=0, step=1, limit=4
    $region2: #{tpu_custom_call.1} parent=1 // loop_pre_header
      _
    $region3: #{tpu_custom_call.1} parent=1 // loop_header
      %s16 = sphi 0, %s20
      %p17 = scmp.ge.s32.totalorder %s16, 4
      %s26 = sphi 0, %s28
      %s29 = sphi 0, %s26
      %s30 = sphi 0, %s29
      %s46 = sphi 0, %s30
      %s50 = sphi 0, %s50
      %s52 = sphi 0, %s50
      %s53 = sphi 0, %s52
      %s67 = sphi 0, %s53
      %s71 = sphi 0, %s71
      %s73 = sphi 0, %s71
      %s74 = sphi 0, %s73
      %s88 = sphi 0, %s74
      %s94 = sphi 0, %s96
      %s97 = sphi 0, %s94
      %s98 = sphi 0, %s97
      %s114 = sphi 0, %s98
    $region4: #{tpu_custom_call.1} parent=1 // loop_header_branch
      %19 = sbr.rel (%p17) target = $region8
    $region5: #{tpu_custom_call.1} parent=1 // loop_body
      %s21 = ssub.s32 %s16, 1
      %s22 = ssub.s32 %s16, 2
      %s23 = sadd.s32 %s16, 1
      %s24 = ssub.s32 %s16, %s23
      %p25 = scmp.eq.s32.totalorder %s24, 0
      %s27 = sadd.s32 %s26, 1
      %s28 = scalar_select %p25, %s26, %s27
      %p31 = pneg %p25
      %p32 = scmp.eq.s32.totalorder %s16, 1
      %p33 = por %p31, %p32
      %p34 = scmp.ne.s32.totalorder %s26, %s29
      %p35 = scmp.eq.s32.totalorder %s16, 0
      %p36 = por %p34, %p35
      %p37 = scmp.ne.s32.totalorder %s26, %s29
      %p38 = scmp.eq.s32.totalorder %s21, 1
      %p39 = por %p37, %p38
      %p40 = scmp.ne.s32.totalorder %s29, %s30
      %p41 = scmp.eq.s32.totalorder %s21, 0
      %p42 = por %p40, %p41
      %p43 = scmp.ne.s32.totalorder %s29, %s30
      %p44 = scmp.eq.s32.totalorder %s22, 1
      %p45 = por %p43, %p44
      %p47 = scmp.ne.s32.totalorder %s30, %s46
      %p48 = scmp.eq.s32.totalorder %s22, 0
      %p49 = por %p47, %p48
      %s51 = sadd.s32 %s50, 1
      %p54 = scmp.eq.s32.totalorder %s16, 1
      %p55 = scmp.ne.s32.totalorder %s50, %s52
      %p56 = scmp.eq.s32.totalorder %s16, 0
      %p57 = por %p55, %p56
      %p58 = scmp.ne.s32.totalorder %s50, %s52
      %p59 = scmp.eq.s32.totalorder %s21, 1
      %p60 = por %p58, %p59
      %p61 = scmp.ne.s32.totalorder %s52, %s53
      %p62 = scmp.eq.s32.totalorder %s21, 0
      %p63 = por %p61, %p62
      %p64 = scmp.ne.s32.totalorder %s52, %s53
      %p65 = scmp.eq.s32.totalorder %s22, 1
      %p66 = por %p64, %p65
      %p68 = scmp.ne.s32.totalorder %s53, %s67
      %p69 = scmp.eq.s32.totalorder %s22, 0
      %p70 = por %p68, %p69
      %s72 = sadd.s32 %s71, 1
      %p75 = scmp.eq.s32.totalorder %s16, 1
      %p76 = scmp.ne.s32.totalorder %s71, %s73
      %p77 = scmp.eq.s32.totalorder %s16, 0
      %p78 = por %p76, %p77
      %p79 = scmp.ne.s32.totalorder %s71, %s73
      %p80 = scmp.eq.s32.totalorder %s21, 1
      %p81 = por %p79, %p80
      %p82 = scmp.ne.s32.totalorder %s73, %s74
      %p83 = scmp.eq.s32.totalorder %s21, 0
      %p84 = por %p82, %p83
      %p85 = scmp.ne.s32.totalorder %s73, %s74
      %p86 = scmp.eq.s32.totalorder %s22, 1
      %p87 = por %p85, %p86
      %p89 = scmp.ne.s32.totalorder %s74, %s88
      %p90 = scmp.eq.s32.totalorder %s22, 0
      %p91 = por %p89, %p90
      %s92 = ssub.s32 %s16, %s23
      %p93 = scmp.eq.s32.totalorder %s92, 0
      %s95 = sadd.s32 %s94, 1
      %s96 = scalar_select %p93, %s94, %s95
      %p99 = pneg %p93
      %p100 = scmp.eq.s32.totalorder %s16, 1
      %p101 = por %p99, %p100
      %p102 = scmp.ne.s32.totalorder %s94, %s97
      %p103 = scmp.eq.s32.totalorder %s16, 0
      %p104 = por %p102, %p103
      %p105 = scmp.ne.s32.totalorder %s94, %s97
      %p106 = scmp.eq.s32.totalorder %s21, 1
      %p107 = por %p105, %p106
      %p108 = scmp.ne.s32.totalorder %s97, %s98
      %p109 = scmp.eq.s32.totalorder %s21, 0
      %p110 = por %p108, %p109
      %p111 = scmp.ne.s32.totalorder %s97, %s98
      %p112 = scmp.eq.s32.totalorder %s22, 1
      %p113 = por %p111, %p112
      %p115 = scmp.ne.s32.totalorder %s98, %s114
      %p116 = scmp.eq.s32.totalorder %s22, 0
      %p117 = por %p115, %p116
      %p118 = scmp.le.s32.totalorder 1, %s16
      %p119 = scmp.lt.s32.totalorder %s16, 3
      %p120 = pnand %p118, %p119
      %p121 = pneg %p120
      // Predicated region
      $region9: #{tpu_custom_call.1} parent=5 // pred_check
        _
      $region10: #{tpu_custom_call.1} parent=5 // pred_check_branch
        %123 = sbr.rel (%p120) target = $region12
      $region11: #{tpu_custom_call.1} parent=5 // pred_region
        %s124 = ssub.s32 %s16, 1
        // Predicated region
        $region13: #{tpu_custom_call.1} parent=11 // pred_check
          %p125 = pneg %p63
        $region14: #{tpu_custom_call.1} parent=11 // pred_check_branch
          %127 = sbr.rel (%p125) target = $region16
        $region15: #{tpu_custom_call.1} parent=11 // pred_region
          %129 = vsyncadd [#allocation6], 0
          %s130 = sshll.u32 %s1, 4
          %s131 = int_to_ptr.hbm [resolvable:$true] %s130
          %s132 = sshll.u32 [#allocation5], 4
          %s133 = int_to_ptr.vmem [resolvable:$true] %s132
          %138 = dma.hbm_to_vmem [thread:$0]  %s131, 1536, %s133, [#allocation6], 128, 128, 8
        $region16: #{tpu_custom_call.1} parent=11 // pred_fallthru
          _
        // Predicated region
        $region17: #{tpu_custom_call.1} parent=11 // pred_check
          %p139 = pneg %p84
        $region18: #{tpu_custom_call.1} parent=11 // pred_check_branch
          %141 = sbr.rel (%p139) target = $region20
        $region19: #{tpu_custom_call.1} parent=11 // pred_region
          _
        $region20: #{tpu_custom_call.1} parent=11 // pred_fallthru
          _
      $region12: #{tpu_custom_call.1} parent=5 // pred_fallthru
        _
      %p142 = scmp.lt.s32.totalorder %s16, 2
      // Predicated region
      $region21: #{tpu_custom_call.1} parent=5 // pred_check
        %p143 = pneg %p142
      $region22: #{tpu_custom_call.1} parent=5 // pred_check_branch
        %145 = sbr.rel (%p143) target = $region24
      $region23: #{tpu_custom_call.1} parent=5 // pred_region
        // Predicated region
        $region25: #{tpu_custom_call.1} parent=23 // pred_check
          %p146 = pneg %p36
        $region26: #{tpu_custom_call.1} parent=23 // pred_check_branch
          %148 = sbr.rel (%p146) target = $region28
        $region27: #{tpu_custom_call.1} parent=23 // pred_region
          %s149 = sand.u32 %s26, 1
          %s150 = scalar_lea.sflag [#allocation3], %s149
          %s151 = sand.u32 %s26, 1
          %s152 = smul.addr %s151, 16
          %s153 = scalar_lea.vmem [#allocation2], %s152
          %155 = vsyncadd %s150, 0
          %s156 = smul.addr %s16, 2
          %s157 = smul.addr %s156, 8
          %s158 = scalar_lea.hbm %s0, %s157
          %s159 = sshll.u32 %s158, 4
          %s160 = int_to_ptr.hbm [resolvable:$true] %s159
          %s161 = sshll.u32 %s153, 4
          %s162 = int_to_ptr.vmem [resolvable:$true] %s161
          %167 = dma.hbm_to_vmem [thread:$0]  %s160, 256, %s162, %s150, 128, 128, 8
        $region28: #{tpu_custom_call.1} parent=23 // pred_fallthru
          _
      $region24: #{tpu_custom_call.1} parent=5 // pred_fallthru
        _
      %p168 = scmp.le.s32.totalorder 1, %s16
      %p169 = scmp.lt.s32.totalorder %s16, 3
      %p170 = pnand %p168, %p169
      %p171 = pneg %p170
      // Predicated region
      $region29: #{tpu_custom_call.1} parent=5 // pred_check
        _
      $region30: #{tpu_custom_call.1} parent=5 // pred_check_branch
        %173 = sbr.rel (%p170) target = $region32
      $region31: #{tpu_custom_call.1} parent=5 // pred_region
        %s174 = ssub.s32 %s16, 1
        %s175 = sand.u32 %s29, 1
        %s176 = scalar_lea.sflag [#allocation3], %s175
        %s177 = sand.u32 %s29, 1
        %s178 = smul.addr %s177, 16
        %s179 = scalar_lea.vmem [#allocation2], %s178
        // Predicated region
        $region33: #{tpu_custom_call.1} parent=31 // pred_check
          %p180 = pneg %p42
        $region34: #{tpu_custom_call.1} parent=31 // pred_check_branch
          %182 = sbr.rel (%p180) target = $region36
        $region35: #{tpu_custom_call.1} parent=31 // pred_region
          %184 = dma.done %s176, 256
        $region36: #{tpu_custom_call.1} parent=31 // pred_fallthru
          _
        // Predicated region
        $region37: #{tpu_custom_call.1} parent=31 // pred_check
          %p185 = pneg %p63
        $region38: #{tpu_custom_call.1} parent=31 // pred_check_branch
          %187 = sbr.rel (%p185) target = $region40
        $region39: #{tpu_custom_call.1} parent=31 // pred_region
          %189 = dma.done [#allocation6], 1536
        $region40: #{tpu_custom_call.1} parent=31 // pred_fallthru
          _
        %s190 = sand.u32 %s29, 1
        %s191 = scalar_lea.sflag [#allocation3], %s190
        %s192 = sand.u32 %s29, 1
        %s193 = smul.addr %s192, 16
        %s194 = scalar_lea.vmem [#allocation2], %s193
        %p195 = pneg %p42
        %p196 = pneg %p39
        %p197 = pneg %p63
        %p198 = pneg %p60
        %p199 = pneg %p84
        %p200 = pneg %p81
        %p201 = pneg %p110
        %p202 = pneg %p107
        %s203 = sand.u32 %s97, 1
        %s204 = scalar_lea.sflag [#allocation4], %s203
        %s205 = sand.u32 %s97, 1
        %s206 = smul.addr %s205, 8
        %s207 = scalar_lea.vmem [#allocation7], %s206
        %v208 = vld [vmem:[%s179] sm:$0xff]
        %v209 = vld [vmem:[#allocation5] sm:$0xff]
        %v210 = vld [vmem:[#allocation5 + $0x8] sm:$0xff]
        %v211 = vld [vmem:[#allocation5 + $0x10] sm:$0xff]
        %v212 = vld [vmem:[#allocation5 + $0x18] sm:$0xff]
        %v213 = vld [vmem:[%s179 + $0x1] sm:$0xff]
        %s214 = scalar_lea.vmem [#allocation5], 32
        %v215 = vld [vmem:[%s214] sm:$0xff]
        %v216 = vld [vmem:[%s214 + $0x8] sm:$0xff]
        %v217 = vld [vmem:[%s214 + $0x10] sm:$0xff]
        %v218 = vld [vmem:[%s214 + $0x18] sm:$0xff]
        %vm219 = vcmask 261120
        %v221 = vsel %vm219, %v213, 0
        %223 = vmatpush.msra.mxu0 0.0
        %224 = vmatpush.msra.mxu0 0.0
        %225 = vmatpush.msra.mxu0 0.0
        %226 = vmatpush.msra.mxu0 0.0
        %227 = vmatpush.msra.mxu0 0.0
        %228 = vmatpush.msra.mxu0 0.0
        %229 = vmatpush.msra.mxu0 0.0
        %230 = vmatpush.msra.mxu0 0.0
        %231 = vmatpush.msra.mxu0 0.0
        %232 = vmatpush.msra.mxu0 0.0
        %233 = vmatpush.msra.mxu0 0.0
        %234 = vmatpush.msra.mxu0 0.0
        %235 = vmatpush.msra.mxu0 %v218
        %236 = vmatpush.msra.mxu0 %v217
        %237 = vmatpush.msra.mxu0 %v216
        %238 = vmatpush.msra.mxu0 %v215
        %239 = vmatmul.f32.gmra.mxu0 %v221
        %v240 = vpop.f32.mrf.mxu0
        %v241 = vadd.f32 0.0, %v240
        %242 = vdwg.mxu0
        %v244 = vsel %vm219, %v208, 0
        %246 = vmatpush.msra.mxu0 0.0
        %247 = vmatpush.msra.mxu0 0.0
        %248 = vmatpush.msra.mxu0 0.0
        %249 = vmatpush.msra.mxu0 0.0
        %250 = vmatpush.msra.mxu0 0.0
        %251 = vmatpush.msra.mxu0 0.0
        %252 = vmatpush.msra.mxu0 0.0
        %253 = vmatpush.msra.mxu0 0.0
        %254 = vmatpush.msra.mxu0 0.0
        %255 = vmatpush.msra.mxu0 0.0
        %256 = vmatpush.msra.mxu0 0.0
        %257 = vmatpush.msra.mxu0 0.0
        %258 = vmatpush.msra.mxu0 %v212
        %259 = vmatpush.msra.mxu0 %v211
        %260 = vmatpush.msra.mxu0 %v210
        %261 = vmatpush.msra.mxu0 %v209
        %262 = vmatmul.f32.gmra.mxu0 %v244
        %v263 = vpop.f32.mrf.mxu0
        %v264 = vadd.f32 %v241, %v263
        %265 = vdwg.mxu0
        %v266 = vld [vmem:[%s179 + $0x2] sm:$0xff]
        %s267 = scalar_lea.vmem [#allocation5], 64
        %v268 = vld [vmem:[%s267] sm:$0xff]
        %v269 = vld [vmem:[%s267 + $0x8] sm:$0xff]
        %v270 = vld [vmem:[%s267 + $0x10] sm:$0xff]
        %v271 = vld [vmem:[%s267 + $0x18] sm:$0xff]
        %v273 = vsel %vm219, %v266, 0
        %275 = vmatpush.msra.mxu0 0.0
        %276 = vmatpush.msra.mxu0 0.0
        %277 = vmatpush.msra.mxu0 0.0
        %278 = vmatpush.msra.mxu0 0.0
        %279 = vmatpush.msra.mxu0 0.0
        %280 = vmatpush.msra.mxu0 0.0
        %281 = vmatpush.msra.mxu0 0.0
        %282 = vmatpush.msra.mxu0 0.0
        %283 = vmatpush.msra.mxu0 0.0
        %284 = vmatpush.msra.mxu0 0.0
        %285 = vmatpush.msra.mxu0 0.0
        %286 = vmatpush.msra.mxu0 0.0
        %287 = vmatpush.msra.mxu0 %v271
        %288 = vmatpush.msra.mxu0 %v270
        %289 = vmatpush.msra.mxu0 %v269
        %290 = vmatpush.msra.mxu0 %v268
        %291 = vmatmul.f32.gmra.mxu0 %v273
        %v292 = vpop.f32.mrf.mxu0
        %v293 = vadd.f32 0.0, %v292
        %294 = vdwg.mxu0
        %v295 = vadd.f32 %v264, %v293
        %v296 = vld [vmem:[%s2] sm:$0x1]
        %v298 = vperm.slane %v296, 0
        %v300 = vadd.f32 %v295, %v298
        %v301 = vmax.f32 %v300, 0.0
        %302 = vst [vmem:[%s207] sm:$0xff] %v301
        %s303 = sand.u32 %s97, 1
        %s304 = scalar_lea.sflag [#allocation4], %s303
        %s305 = sand.u32 %s97, 1
        %s306 = smul.addr %s305, 8
        %s307 = scalar_lea.vmem [#allocation7], %s306
        // Predicated region
        $region41: #{tpu_custom_call.1} parent=31 // pred_check
          %p308 = pneg %p107
        $region42: #{tpu_custom_call.1} parent=31 // pred_check_branch
          %310 = sbr.rel (%p308) target = $region44
        $region43: #{tpu_custom_call.1} parent=31 // pred_region
          %312 = vsyncadd %s304, 0
          %s313 = smul.addr %s21, 8
          %s314 = scalar_lea.hbm %s3, %s313
          %s316 = sshll.u32 %s307, 4
          %s317 = int_to_ptr.vmem [resolvable:$true] %s316
          %s318 = sshll.u32 %s314, 4
          %s319 = int_to_ptr.hbm [resolvable:$true] %s318
          %321 = dma.vmem_to_hbm [thread:$0]  %s317, 128, %s319, %s304
        $region44: #{tpu_custom_call.1} parent=31 // pred_fallthru
          _
      $region32: #{tpu_custom_call.1} parent=5 // pred_fallthru
        _
      %p322 = scmp.le.s32.totalorder 2, %s16
      // Predicated region
      $region45: #{tpu_custom_call.1} parent=5 // pred_check
        %p323 = pneg %p322
      $region46: #{tpu_custom_call.1} parent=5 // pred_check_branch
        %325 = sbr.rel (%p323) target = $region48
      $region47: #{tpu_custom_call.1} parent=5 // pred_region
        %s326 = ssub.s32 %s16, 2
        // Predicated region
        $region49: #{tpu_custom_call.1} parent=47 // pred_check
          %p327 = pneg %p113
        $region50: #{tpu_custom_call.1} parent=47 // pred_check_branch
          %329 = sbr.rel (%p327) target = $region52
        $region51: #{tpu_custom_call.1} parent=47 // pred_region
          %s330 = sand.u32 %s98, 1
          %s331 = scalar_lea.sflag [#allocation4], %s330
          %s332 = sand.u32 %s98, 1
          %s333 = smul.addr %s332, 8
          %s334 = scalar_lea.vmem [#allocation7], %s333
          %336 = dma.done %s331, 128
        $region52: #{tpu_custom_call.1} parent=47 // pred_fallthru
          _
      $region48: #{tpu_custom_call.1} parent=5 // pred_fallthru
        _
    $region6: #{tpu_custom_call.1} parent=1 // loop_footer
      %s20 = sadd.s32 1, %s16
    $region7: #{tpu_custom_call.1} parent=1 // loop_footer_branch
      %15 = sbr.rel target = $region3
    $region8: #{tpu_custom_call.1} parent=1 // loop_exit
      _
    %337 = vsyncpa [#allocation3], 1
    %s338 = scalar_lea.sflag [#allocation3], 1
    %339 = vsyncpa %s338, 1
    %340 = vsyncpa [#allocation6], 1
    %341 = vsyncpa [#allocation4], 1
    %s342 = scalar_lea.sflag [#allocation4], 1
    %343 = vsyncpa %s342, 1

</llo_original>
